<compile_context>
chip_gen: v5e
topology: v5e:2x2
jax: 0.10.0
libtpu: 0.0.40
codegen_flags: <defaults>
</compile_context>

<pallas_src>
import functools

import jax
import jax.numpy as jnp
from jax import lax
from jax.experimental import pallas as pl
from jax.experimental.pallas import tpu as pltpu


def _round_up(n, m):
    return ((n + m - 1) // m) * m


# Tiling knobs.
_X_TILE_BYTES = 2 * 1024 * 1024   # per-buffer budget for the streamed bf16 x tile
_MAX_TB = 64 * 1024               # cap on batch-tile lanes per grid step
_CHUNK = 2048                     # in-kernel compute chunk (lanes)
_LANES = 128


def _choose_tiles(batch, feat, block_b):
    """Pick (TB, TC): TB = DMA batch tile, TC = in-kernel compute chunk.

    TB is a multiple of 128 (lane-dense, (8,128)-legal), bounded by a
    per-buffer VMEM budget, and a multiple of TC so the chunk loop is exact.
    """
    budget_tb = max(_LANES, (_X_TILE_BYTES // (feat * 2)) // _LANES * _LANES)
    tb = min(budget_tb, _MAX_TB, _round_up(max(batch, 1), _LANES))
    if block_b is not None:
        tb = min(tb, max(_LANES, _round_up(block_b, _LANES)))
    tc = min(tb, _CHUNK)
    tb = _round_up(tb, tc)
    return tb, tc


def _dnsnet_kernel(x_ref, w1_ref, b1_ref, w2_ref, b2_ref, w3_ref, b3_ref,
                   o_ref, *, tc):
    """One batch tile: x_ref (TB, F) bf16 -> o_ref (1, TB) f32.

    Activations keep the batch on the lane axis ((out_features, chunk) tiles)
    so every store is a full-width unmasked vst.  The fc1->fc2->fc3 chain is
    evaluated in lane chunks of `tc`, so intermediates scale with the chunk,
    not with the (large) DMA tile.
    """
    tb = x_ref.shape[0]
    nchunks = tb // tc

    w1 = w1_ref[...]            # (64, F)  bf16
    b1 = b1_ref[...]            # (64, 1)  f32
    w2 = w2_ref[...]            # (32, 64) bf16
    b2 = b2_ref[...]            # (32, 1)  f32
    w3 = w3_ref[...]            # (32, 1)  f32
    b3 = b3_ref[...]            # (1, 1)   f32

    # Static chunk loop: offsets are compile-time multiples of tc (>=128), so
    # all loads/stores are aligned and unmasked; each chunk's intermediates
    # die at its output store.
    for c in range(nchunks):
        lo = c * tc
        xc = x_ref[lo:lo + tc, :]                               # (tc, F) bf16

        # fc1: contract F (last dims of both) -> (64, tc); MXU, f32 accum.
        # Mosaic performs the (tc, F) -> (F, tc) tile transpose on the XLU.
        h1 = lax.dot_general(w1, xc, (((1,), (1,)), ((), ())),
                             preferred_element_type=jnp.float32)
        h1 = jnp.maximum(h1 + b1, 0.0)                          # f32 bias + ReLU

        # fc2: (32, 64) @ (64, tc) -> (32, tc); MXU, f32 accum.
        h2 = jnp.dot(w2, h1.astype(jnp.bfloat16),
                     preferred_element_type=jnp.float32)
        h2 = jnp.maximum(h2 + b2, 0.0)

        # fc3 (32 -> 1): VPU multiply + sublane (XLU) reduction instead of an
        # M=1 MXU matmul.
        z = jnp.sum(h2 * w3, axis=0, keepdims=True) + b3        # (1, tc)

        o_ref[:, lo:lo + tc] = jax.nn.sigmoid(z).astype(o_ref.dtype)


def dnsnet_forward(x, w1, b1, w2, b2, w3, b3, *, block_b=None,
                   core_parallel=False):
    """DNSNet forward: sigmoid(fc3(relu(fc2(relu(fc1(x)))))).

    x: (B, F) float32.  Weights in PyTorch nn.Linear layout: w_l (out, in),
    b_l (out,).  Returns (B, 1) float32 probabilities.
    """
    B, F = x.shape
    TB, TC = _choose_tiles(B, F, block_b)
    B_pad = _round_up(max(B, 1), TB)
    grid = (B_pad // TB,)

    # Stream x in its natural (B, F) layout: only a bf16 cast + optional batch
    # pad here (fuses into one copy under the caller's jit); no transpose pass.
    x_bf = x.astype(jnp.bfloat16)
    if B_pad != B:
        x_bf = jnp.pad(x_bf, ((0, B_pad - B), (0, 0)))   # padded rows -> bias-only
                                                         # lanes, sliced off below.

    w1c = w1.astype(jnp.bfloat16)                        # (64, F)
    w2c = w2.astype(jnp.bfloat16)                        # (32, 64)
    w3c = w3.T.astype(jnp.float32)                       # (32, 1)  f32: VPU layer
    b1c = b1.reshape(64, 1).astype(jnp.float32)
    b2c = b2.reshape(32, 1).astype(jnp.float32)
    b3c = b3.reshape(1, 1).astype(jnp.float32)

    def resident(i):                                     # weights stay VMEM-resident
        return (0, 0)

    cost = pl.CostEstimate(
        flops=2 * B_pad * (F * 64 + 64 * 32 + 32),
        transcendentals=B_pad,
        bytes_accessed=(x_bf.size * 2 + B_pad * 4
                        + w1c.size * 2 + w2c.size * 2
                        + (w3c.size + b1c.size + b2c.size + b3c.size) * 4),
    )

    # TODO(synk): on v7x pass core_parallel=True to split batch tiles across
    # the chip's two TensorCores; PARALLEL is kept as the default because it
    # is accepted on every generation.
    dims = (pltpu.CORE_PARALLEL,) if core_parallel else (pltpu.PARALLEL,)

    out = pl.pallas_call(
        functools.partial(_dnsnet_kernel, tc=TC),
        out_shape=jax.ShapeDtypeStruct((1, B_pad), jnp.float32),
        grid=grid,
        in_specs=[
            pl.BlockSpec((TB, F), lambda i: (i, 0)),     # x tile: auto double-buffered
            pl.BlockSpec((64, F), resident),
            pl.BlockSpec((64, 1), resident),
            pl.BlockSpec((32, 64), resident),
            pl.BlockSpec((32, 1), resident),
            pl.BlockSpec((32, 1), resident),
            pl.BlockSpec((1, 1), resident),
        ],
        out_specs=pl.BlockSpec((1, TB), lambda i: (0, i)),   # lane-dense output
        compiler_params=pltpu.CompilerParams(
            dimension_semantics=dims,
            vmem_limit_bytes=32 * 1024 * 1024),
        cost_estimate=cost,
    )(x_bf, w1c, b1c, w2c, b2c, w3c, b3c)

    return out[:, :B].T                                  # (B, 1)


def init_params(input_size, key):
    """PyTorch nn.Linear-style init: W (out, in), b (out,), uniform +-1/sqrt(fan_in)."""
    def linear(k, fan_in, fan_out):
        kw, kb = jax.random.split(k)
        bound = 1.0 / jnp.sqrt(jnp.float32(fan_in))
        w = jax.random.uniform(kw, (fan_out, fan_in), jnp.float32, -bound, bound)
        b = jax.random.uniform(kb, (fan_out,), jnp.float32, -bound, bound)
        return w, b

    k1, k2, k3 = jax.random.split(key, 3)
    w1, b1 = linear(k1, input_size, 64)
    w2, b2 = linear(k2, 64, 32)
    w3, b3 = linear(k3, 32, 1)
    return w1, b1, w2, b2, w3, b3


def reference_forward(x, w1, b1, w2, b2, w3, b3, mirror_bf16=True):
    """Pure-JAX reference. mirror_bf16=True matches the kernel's mixed precision."""
    cast = (lambda a: a.astype(jnp.bfloat16)) if mirror_bf16 else (lambda a: a)
    h1 = jnp.dot(cast(x), cast(w1).T, preferred_element_type=jnp.float32) + b1
    h1 = jnp.maximum(h1, 0.0)
    h2 = jnp.dot(cast(h1), cast(w2).T, preferred_element_type=jnp.float32) + b2
    h2 = jnp.maximum(h2, 0.0)
    z = jnp.dot(h2, w3.T) + b3
    return jax.nn.sigmoid(z)


if __name__ == "__main__":
    key = jax.random.PRNGKey(0)
    k_params, k_x, k_x2 = jax.random.split(key, 3)

    batch = 8
    input_size = 16                       # DNS feature vector length (synthetic)

    params = init_params(input_size, k_params)
    x = jax.random.normal(k_x, (batch, input_size), jnp.float32)

    fwd = jax.jit(dnsnet_forward)
    out = jax.block_until_ready(fwd(x, *params))
    assert out.shape == (batch, 1)

    ref_mixed = reference_forward(x, *params, mirror_bf16=True)
    ref_f32 = reference_forward(x, *params, mirror_bf16=False)
    assert jnp.allclose(out, ref_mixed, atol=1e-4, rtol=1e-4), "mixed-precision mismatch"
    assert jnp.allclose(out, ref_f32, atol=5e-2, rtol=5e-2), "f32 sanity mismatch"

    # Larger batch: default path exercises the in-kernel chunk loop (TB=4096,
    # TC=2048 -> 2 chunks); block_b=256 path exercises the multi-step grid
    # (12 batch tiles) with padding.
    batch2 = 3000
    x2 = jax.random.normal(k_x2, (batch2, input_size), jnp.float32)
    ref2 = reference_forward(x2, *params, mirror_bf16=True)

    out2 = jax.block_until_ready(fwd(x2, *params))
    assert out2.shape == (batch2, 1)
    assert jnp.allclose(out2, ref2, atol=1e-4, rtol=1e-4), "chunked-tile mismatch"

    fwd_small = jax.jit(functools.partial(dnsnet_forward, block_b=256))
    out3 = jax.block_until_ready(fwd_small(x2, *params))
    assert out3.shape == (batch2, 1)
    assert jnp.allclose(out3, ref2, atol=1e-4, rtol=1e-4), "gridded batch mismatch"

    print("KERNEL_OK")
</pallas_src>

<mosaic_0001>
module attributes {stable_mosaic.version = 11 : i64} {
  func.func @_dnsnet_kernel(%arg0: i32, %arg1: memref<128x16xbf16, #tpu.memory_space<vmem>>, %arg2: memref<64x16xbf16, #tpu.memory_space<vmem>>, %arg3: memref<64x1xf32, #tpu.memory_space<vmem>>, %arg4: memref<32x64xbf16, #tpu.memory_space<vmem>>, %arg5: memref<32x1xf32, #tpu.memory_space<vmem>>, %arg6: memref<32x1xf32, #tpu.memory_space<vmem>>, %arg7: memref<1x1xf32, #tpu.memory_space<vmem>>, %arg8: memref<1x128xf32, #tpu.memory_space<vmem>>) attributes {dimension_semantics = [#tpu.dimension_semantics<parallel>], iteration_bounds = array<i64: 1>, scalar_prefetch = 0 : i64, scratch_operands = 0 : i64, tpu.core_type = #tpu.core_type<tc>, window_params = [{transform_indices = @transform_0, window_bounds = array<i64: 128, 16>}, {pipeline_mode = #tpu.pipeline_mode<synchronous>, transform_indices = @transform_1, window_bounds = array<i64: 64, 16>}, {pipeline_mode = #tpu.pipeline_mode<synchronous>, transform_indices = @transform_2, window_bounds = array<i64: 64, 1>}, {pipeline_mode = #tpu.pipeline_mode<synchronous>, transform_indices = @transform_3, window_bounds = array<i64: 32, 64>}, {pipeline_mode = #tpu.pipeline_mode<synchronous>, transform_indices = @transform_4, window_bounds = array<i64: 32, 1>}, {pipeline_mode = #tpu.pipeline_mode<synchronous>, transform_indices = @transform_5, window_bounds = array<i64: 32, 1>}, {pipeline_mode = #tpu.pipeline_mode<synchronous>, transform_indices = @transform_6, window_bounds = array<i64: 1, 1>}, {transform_indices = @transform_7, window_bounds = array<i64: 1, 128>}]} {
    %c0 = arith.constant 0 : index
    %c0_0 = arith.constant 0 : index
    %0 = vector.load %arg2[%c0, %c0_0] : memref<64x16xbf16, #tpu.memory_space<vmem>>, vector<64x16xbf16>
    %c0_1 = arith.constant 0 : index
    %c0_2 = arith.constant 0 : index
    %1 = vector.load %arg3[%c0_1, %c0_2] : memref<64x1xf32, #tpu.memory_space<vmem>>, vector<64x1xf32>
    %c0_3 = arith.constant 0 : index
    %c0_4 = arith.constant 0 : index
    %2 = vector.load %arg4[%c0_3, %c0_4] : memref<32x64xbf16, #tpu.memory_space<vmem>>, vector<32x64xbf16>
    %c0_5 = arith.constant 0 : index
    %c0_6 = arith.constant 0 : index
    %3 = vector.load %arg5[%c0_5, %c0_6] : memref<32x1xf32, #tpu.memory_space<vmem>>, vector<32x1xf32>
    %c0_7 = arith.constant 0 : index
    %c0_8 = arith.constant 0 : index
    %4 = vector.load %arg6[%c0_7, %c0_8] : memref<32x1xf32, #tpu.memory_space<vmem>>, vector<32x1xf32>
    %c0_9 = arith.constant 0 : index
    %c0_10 = arith.constant 0 : index
    %5 = vector.load %arg7[%c0_9, %c0_10] : memref<1x1xf32, #tpu.memory_space<vmem>>, vector<1x1xf32>
    %c0_11 = arith.constant 0 : index
    %c0_12 = arith.constant 0 : index
    %6 = vector.load %arg1[%c0_11, %c0_12] : memref<128x16xbf16, #tpu.memory_space<vmem>>, vector<128x16xbf16>
    %cst = arith.constant dense<0.000000e+00> : vector<64x128xf32>
    %7 = tpu.matmul %0, %6, %cst {dimension_numbers = #tpu.dot_dimension_numbers<[1], [1], [0], [0], [0, 0, 1, 0], [], []>} : vector<64x16xbf16>, vector<128x16xbf16>, vector<64x128xf32> -> vector<64x128xf32>
    %8 = vector.broadcast %1 : vector<64x1xf32> to vector<64x128xf32>
    %9 = arith.addf %7, %8 : vector<64x128xf32>
    %cst_13 = arith.constant 0.000000e+00 : f32
    %10 = vector.broadcast %cst_13 : f32 to vector<64x128xf32>
    %11 = arith.maximumf %9, %10 : vector<64x128xf32>
    %12 = arith.truncf %11 : vector<64x128xf32> to vector<64x128xbf16>
    %cst_14 = arith.constant dense<0.000000e+00> : vector<32x128xf32>
    %13 = tpu.matmul %2, %12, %cst_14 {dimension_numbers = #tpu.dot_dimension_numbers<[1], [0], [0], [1], [0, 0, 1, 1], [], []>} : vector<32x64xbf16>, vector<64x128xbf16>, vector<32x128xf32> -> vector<32x128xf32>
    %14 = vector.broadcast %3 : vector<32x1xf32> to vector<32x128xf32>
    %15 = arith.addf %13, %14 : vector<32x128xf32>
    %cst_15 = arith.constant 0.000000e+00 : f32
    %16 = vector.broadcast %cst_15 : f32 to vector<32x128xf32>
    %17 = arith.maximumf %15, %16 : vector<32x128xf32>
    %18 = vector.broadcast %4 : vector<32x1xf32> to vector<32x128xf32>
    %19 = arith.mulf %17, %18 : vector<32x128xf32>
    %cst_16 = arith.constant dense<0.000000e+00> : vector<128xf32>
    %20 = vector.multi_reduction <add>, %19, %cst_16 [0] : vector<32x128xf32> to vector<128xf32>
    %21 = vector.shape_cast %20 : vector<128xf32> to vector<1x128xf32>
    %22 = vector.broadcast %5 : vector<1x1xf32> to vector<1x128xf32>
    %23 = arith.addf %21, %22 : vector<1x128xf32>
    %24 = arith.negf %23 : vector<1x128xf32>
    %25 = math.exp %24 : vector<1x128xf32>
    %cst_17 = arith.constant 1.000000e+00 : f32
    %26 = vector.broadcast %cst_17 : f32 to vector<1x128xf32>
    %27 = arith.addf %26, %25 : vector<1x128xf32>
    %28 = arith.divf %26, %27 : vector<1x128xf32>
    %c0_18 = arith.constant 0 : index
    %c0_19 = arith.constant 0 : index
    %29 = vector.load %arg8[%c0_18, %c0_19] : memref<1x128xf32, #tpu.memory_space<vmem>>, vector<1x128xf32>
    tpu.vector_store %arg8[%c0_18, %c0_19], %28 {strides = array<i32>} : memref<1x128xf32, #tpu.memory_space<vmem>>, vector<1x128xf32>,
    return
  }
  func.func @transform_0(%arg0: i32) -> (i32, i32) {
    %c0_i32 = arith.constant 0 : i32
    %c0_i32_0 = arith.constant 0 : i32
    return %arg0, %c0_i32 : i32, i32
  }
  func.func @transform_1(%arg0: i32) -> (i32, i32) {
    %c0_i32 = arith.constant 0 : i32
    %c0_i32_0 = arith.constant 0 : i32
    %c0_i32_1 = arith.constant 0 : i32
    return %c0_i32, %c0_i32_0 : i32, i32
  }
  func.func @transform_2(%arg0: i32) -> (i32, i32) {
    %c0_i32 = arith.constant 0 : i32
    %c0_i32_0 = arith.constant 0 : i32
    %c0_i32_1 = arith.constant 0 : i32
    return %c0_i32, %c0_i32_0 : i32, i32
  }
  func.func @transform_3(%arg0: i32) -> (i32, i32) {
    %c0_i32 = arith.constant 0 : i32
    %c0_i32_0 = arith.constant 0 : i32
    %c0_i32_1 = arith.constant 0 : i32
    return %c0_i32, %c0_i32_0 : i32, i32
  }
  func.func @transform_4(%arg0: i32) -> (i32, i32) {
    %c0_i32 = arith.constant 0 : i32
    %c0_i32_0 = arith.constant 0 : i32
    %c0_i32_1 = arith.constant 0 : i32
    return %c0_i32, %c0_i32_0 : i32, i32
  }
  func.func @transform_5(%arg0: i32) -> (i32, i32) {
    %c0_i32 = arith.constant 0 : i32
    %c0_i32_0 = arith.constant 0 : i32
    %c0_i32_1 = arith.constant 0 : i32
    return %c0_i32, %c0_i32_0 : i32, i32
  }
  func.func @transform_6(%arg0: i32) -> (i32, i32) {
    %c0_i32 = arith.constant 0 : i32
    %c0_i32_0 = arith.constant 0 : i32
    %c0_i32_1 = arith.constant 0 : i32
    return %c0_i32, %c0_i32_0 : i32, i32
  }
  func.func @transform_7(%arg0: i32) -> (i32, i32) {
    %c0_i32 = arith.constant 0 : i32
    %c0_i32_0 = arith.constant 0 : i32
    return %c0_i32, %arg0 : i32, i32
  }
}

</mosaic_0001>

<llo_original>
// kernel: dnsnet_forward.1
$region0: #{dnsnet_forward.1}
  #allocation0 [shape = 'u32[]', space=smem, size = 0x4, offset = 0x4, fixed_abs, tag = 'smem constant byte address 0x4 - core index']
  #allocation1 [shape = 'u32[72,128]{1,0:T(1,128)}', space=vmem, size = 0x9000, scoped, tag = 'internal scratch']
  #allocation2 [shape = 'f32[1,1]{1,0:T(1,128)S(1)}', space=vmem, size = 0x200, scoped, tag = 'scoped memory for dnsnet_forward.1']
  %s0 = inlined_call_operand.vmem [shape: bf16[128,16], index: 0, kind: input, shape index: {}]
  %s1 = inlined_call_operand.vmem [shape: bf16[64,16], index: 1, kind: input, shape index: {}]
  %s2 = inlined_call_operand.vmem [shape: f32[64,1], index: 2, kind: input, shape index: {}]
  %s3 = inlined_call_operand.vmem [shape: bf16[32,64], index: 3, kind: input, shape index: {}]
  %s4 = inlined_call_operand.vmem [shape: f32[32,1], index: 4, kind: input, shape index: {}]
  %s5 = inlined_call_operand.vmem [shape: f32[32,1], index: 5, kind: input, shape index: {}]
  %s6 = inlined_call_operand.<no memory space> [shape: f32[1,1], index: 6, kind: input, shape index: {}]
  %s7 = inlined_call_operand.vmem [shape: f32[1,128], index: 7, kind: output, shape index: {}]
  %s8 = sld [smem:[#allocation0]]
  $region38: #{dnsnet_forward.1} parent=0
    _
  %s10 = ssub.s32 1, %s8
  %s11 = scalar_select 0, %s10, %s8
  %v12 = vstv %s6
  %13 = vst [vmem:[#allocation2] sm:$0x1] %v12
  // Predicated region
  $region2: #{dnsnet_forward.1} parent=0 // pred_check
    _
  $region3: #{dnsnet_forward.1} parent=0 // pred_check_branch
    %15 = sbr.rel (0) target = $region5
  $region4: #{dnsnet_forward.1} parent=0 // pred_region
    _
  $region5: #{dnsnet_forward.1} parent=0 // pred_fallthru
    _
  // Predicated region
  $region6: #{dnsnet_forward.1} parent=0 // pred_check
    _
  $region7: #{dnsnet_forward.1} parent=0 // pred_check_branch
    %17 = sbr.rel (0) target = $region9
  $region8: #{dnsnet_forward.1} parent=0 // pred_region
    _
  $region9: #{dnsnet_forward.1} parent=0 // pred_fallthru
    _
  // Predicated region
  $region10: #{dnsnet_forward.1} parent=0 // pred_check
    _
  $region11: #{dnsnet_forward.1} parent=0 // pred_check_branch
    %19 = sbr.rel (0) target = $region13
  $region12: #{dnsnet_forward.1} parent=0 // pred_region
    _
  $region13: #{dnsnet_forward.1} parent=0 // pred_fallthru
    _
  // Predicated region
  $region14: #{dnsnet_forward.1} parent=0 // pred_check
    _
  $region15: #{dnsnet_forward.1} parent=0 // pred_check_branch
    %21 = sbr.rel (0) target = $region17
  $region16: #{dnsnet_forward.1} parent=0 // pred_region
    _
  $region17: #{dnsnet_forward.1} parent=0 // pred_fallthru
    _
  // Predicated region
  $region18: #{dnsnet_forward.1} parent=0 // pred_check
    _
  $region19: #{dnsnet_forward.1} parent=0 // pred_check_branch
    %23 = sbr.rel (0) target = $region21
  $region20: #{dnsnet_forward.1} parent=0 // pred_region
    _
  $region21: #{dnsnet_forward.1} parent=0 // pred_fallthru
    _
  // Predicated region
  $region22: #{dnsnet_forward.1} parent=0 // pred_check
    _
  $region23: #{dnsnet_forward.1} parent=0 // pred_check_branch
    %25 = sbr.rel (0) target = $region25
  $region24: #{dnsnet_forward.1} parent=0 // pred_region
    _
  $region25: #{dnsnet_forward.1} parent=0 // pred_fallthru
    _
  // Predicated region
  $region26: #{dnsnet_forward.1} parent=0 // pred_check
    _
  $region27: #{dnsnet_forward.1} parent=0 // pred_check_branch
    %27 = sbr.rel (0) target = $region29
  $region28: #{dnsnet_forward.1} parent=0 // pred_region
    _
  $region29: #{dnsnet_forward.1} parent=0 // pred_fallthru
    _
  %v29 = vld [vmem:[%s1] sm:$0xf]
  %v30 = vld [vmem:[%s1 + $0x4] sm:$0xf]
  %v31 = vld [vmem:[%s1 + $0x8] sm:$0xf]
  %v32 = vld [vmem:[%s1 + $0xc] sm:$0xf]
  %v33 = vld [vmem:[%s1 + $0x10] sm:$0xf]
  %v34 = vld [vmem:[%s1 + $0x14] sm:$0xf]
  %v35 = vld [vmem:[%s1 + $0x18] sm:$0xf]
  %v36 = vld [vmem:[%s1 + $0x1c] sm:$0xf]
  %v37 = vld [vmem:[%s2] sm:$0xff]
  %v38 = vld [vmem:[%s2 + $0x8] sm:$0xff]
  %v39 = vld [vmem:[%s2 + $0x10] sm:$0xff]
  %v40 = vld [vmem:[%s2 + $0x18] sm:$0xff]
  %v41 = vld [vmem:[%s2 + $0x20] sm:$0xff]
  %v42 = vld [vmem:[%s2 + $0x28] sm:$0xff]
  %v43 = vld [vmem:[%s2 + $0x30] sm:$0xff]
  %v44 = vld [vmem:[%s2 + $0x38] sm:$0xff]
  %v45 = vld [vmem:[%s3] sm:$0xf]
  %v46 = vld [vmem:[%s3 + $0x4] sm:$0xf]
  %v47 = vld [vmem:[%s3 + $0x8] sm:$0xf]
  %v48 = vld [vmem:[%s3 + $0xc] sm:$0xf]
  %v49 = vld [vmem:[%s4] sm:$0xff]
  %v50 = vld [vmem:[%s4 + $0x8] sm:$0xff]
  %v51 = vld [vmem:[%s4 + $0x10] sm:$0xff]
  %v52 = vld [vmem:[%s4 + $0x18] sm:$0xff]
  %v53 = vld [vmem:[%s5] sm:$0xff]
  %v54 = vld [vmem:[%s5 + $0x8] sm:$0xff]
  %v55 = vld [vmem:[%s5 + $0x10] sm:$0xff]
  %v56 = vld [vmem:[%s5 + $0x18] sm:$0xff]
  %v57 = vld [vmem:[#allocation2] sm:$0x1]
  %v58 = vld [vmem:[%s0] sm:$0xf]
  %v59 = vld [vmem:[%s0 + $0x4] sm:$0xf]
  %v60 = vld [vmem:[%s0 + $0x8] sm:$0xf]
  %v61 = vld [vmem:[%s0 + $0xc] sm:$0xf]
  %v62 = vld [vmem:[%s0 + $0x10] sm:$0xf]
  %v63 = vld [vmem:[%s0 + $0x14] sm:$0xf]
  %v64 = vld [vmem:[%s0 + $0x18] sm:$0xf]
  %v65 = vld [vmem:[%s0 + $0x1c] sm:$0xf]
  %v66 = vld [vmem:[%s0 + $0x20] sm:$0xf]
  %v67 = vld [vmem:[%s0 + $0x24] sm:$0xf]
  %v68 = vld [vmem:[%s0 + $0x28] sm:$0xf]
  %v69 = vld [vmem:[%s0 + $0x2c] sm:$0xf]
  %v70 = vld [vmem:[%s0 + $0x30] sm:$0xf]
  %v71 = vld [vmem:[%s0 + $0x34] sm:$0xf]
  %v72 = vld [vmem:[%s0 + $0x38] sm:$0xf]
  %v73 = vld [vmem:[%s0 + $0x3c] sm:$0xf]
  %75 = vset.pattern.permute.xlu0 0
  %76 = vperm.xlu0 %75, %v37
  %v77 = vpop.permute.xlu0 %76
  %80 = vset.pattern.permute.xlu0 0
  %81 = vperm.xlu0 %80, %v38
  %v82 = vpop.permute.xlu0 %81
  %85 = vset.pattern.permute.xlu0 0
  %86 = vperm.xlu0 %85, %v39
  %v87 = vpop.permute.xlu0 %86
  %90 = vset.pattern.permute.xlu0 0
  %91 = vperm.xlu0 %90, %v40
  %v92 = vpop.permute.xlu0 %91
  %95 = vset.pattern.permute.xlu0 0
  %96 = vperm.xlu0 %95, %v41
  %v97 = vpop.permute.xlu0 %96
  %100 = vset.pattern.permute.xlu0 0
  %101 = vperm.xlu0 %100, %v42
  %v102 = vpop.permute.xlu0 %101
  %105 = vset.pattern.permute.xlu0 0
  %106 = vperm.xlu0 %105, %v43
  %v107 = vpop.permute.xlu0 %106
  %110 = vset.pattern.permute.xlu0 0
  %111 = vperm.xlu0 %110, %v44
  %v112 = vpop.permute.xlu0 %111
  %v122 = vunpack.c.l.b16 %v29
  %v123 = vunpack.c.l.b16 %v30
  %v124 = vunpack.c.l.b16 %v31
  %v125 = vunpack.c.l.b16 %v32
  %v126 = vunpack.c.l.b16 %v33
  %v127 = vunpack.c.l.b16 %v34
  %v128 = vunpack.c.l.b16 %v35
  %v129 = vunpack.c.l.b16 %v36
  %v130 = vpack.c.b16 %v123, %v122
  %v131 = vpack.c.b16 %v125, %v124
  %v132 = vpack.c.b16 %v127, %v126
  %v133 = vpack.c.b16 %v129, %v128
  %v150 = vunpack.c.l.b16 %v58
  %v151 = vunpack.c.l.b16 %v59
  %v152 = vunpack.c.l.b16 %v60
  %v153 = vunpack.c.l.b16 %v61
  %v154 = vunpack.c.l.b16 %v62
  %v155 = vunpack.c.l.b16 %v63
  %v156 = vunpack.c.l.b16 %v64
  %v157 = vunpack.c.l.b16 %v65
  %v158 = vunpack.c.l.b16 %v66
  %v159 = vunpack.c.l.b16 %v67
  %v160 = vunpack.c.l.b16 %v68
  %v161 = vunpack.c.l.b16 %v69
  %v162 = vunpack.c.l.b16 %v70
  %v163 = vunpack.c.l.b16 %v71
  %v164 = vunpack.c.l.b16 %v72
  %v165 = vunpack.c.l.b16 %v73
  %v166 = vpack.c.b16 %v151, %v150
  %v167 = vpack.c.b16 %v153, %v152
  %v168 = vpack.c.b16 %v155, %v154
  %v169 = vpack.c.b16 %v157, %v156
  %v170 = vpack.c.b16 %v159, %v158
  %v171 = vpack.c.b16 %v161, %v160
  %v172 = vpack.c.b16 %v163, %v162
  %v173 = vpack.c.b16 %v165, %v164
  %vm174 = vcmask 130048
  %v176 = vsel %vm174, %v130, 0
  %v179 = vsel %vm174, %v131, 0
  %v182 = vsel %vm174, %v132, 0
  %v185 = vsel %vm174, %v133, 0
  %v188 = vsel %vm174, %v166, 0
  %v191 = vsel %vm174, %v167, 0
  %v194 = vsel %vm174, %v168, 0
  %v197 = vsel %vm174, %v169, 0
  %v200 = vsel %vm174, %v170, 0
  %v203 = vsel %vm174, %v171, 0
  %v206 = vsel %vm174, %v172, 0
  %v209 = vsel %vm174, %v173, 0
  %211 = vmatpush.bf16.xpose.msra.mxu0 %v209
  %212 = vmatpush.bf16.xpose.msra.mxu0 %v206
  %213 = vmatpush.bf16.xpose.msra.mxu0 %v203
  %214 = vmatpush.bf16.xpose.msra.mxu0 %v200
  %215 = vmatpush.bf16.xpose.msra.mxu0 %v197
  %216 = vmatpush.bf16.xpose.msra.mxu0 %v194
  %217 = vmatpush.bf16.xpose.msra.mxu0 %v191
  %218 = vmatpush.bf16.xpose.msra.mxu0 %v188
  %219 = vmatmul.bf16.gmra.mxu0 %v176
  %v220 = vpop.f32.mrf.mxu0
  %v221 = vadd.f32 %v77, %v220
  %v222 = vpop.f32.mrf.mxu0
  %v223 = vadd.f32 %v82, %v222
  %224 = vmatmul.bf16.gmra.mxu0 %v179
  %v225 = vpop.f32.mrf.mxu0
  %v226 = vadd.f32 %v87, %v225
  %v227 = vpop.f32.mrf.mxu0
  %v228 = vadd.f32 %v92, %v227
  %229 = vmatmul.bf16.gmra.mxu0 %v182
  %v230 = vpop.f32.mrf.mxu0
  %v231 = vadd.f32 %v97, %v230
  %v232 = vpop.f32.mrf.mxu0
  %v233 = vadd.f32 %v102, %v232
  %234 = vmatmul.bf16.gmra.mxu0 %v185
  %v235 = vpop.f32.mrf.mxu0
  %v236 = vadd.f32 %v107, %v235
  %v237 = vpop.f32.mrf.mxu0
  %v238 = vadd.f32 %v112, %v237
  %239 = vdwg.mxu0
  %v240 = vmax.f32 %v221, 0.0
  %v241 = vmax.f32 %v223, 0.0
  %v242 = vmax.f32 %v226, 0.0
  %v243 = vmax.f32 %v228, 0.0
  %v244 = vmax.f32 %v231, 0.0
  %v245 = vmax.f32 %v233, 0.0
  %v246 = vmax.f32 %v236, 0.0
  %v247 = vmax.f32 %v238, 0.0
  %v248 = vpack.c.bf16 %v241, %v240
  %v249 = vpack.c.bf16 %v243, %v242
  %v250 = vpack.c.bf16 %v245, %v244
  %v251 = vpack.c.bf16 %v247, %v246
  %253 = vset.pattern.permute.xlu0 0
  %254 = vperm.xlu0 %253, %v49
  %v255 = vpop.permute.xlu0 %254
  %258 = vset.pattern.permute.xlu0 0
  %259 = vperm.xlu0 %258, %v50
  %v260 = vpop.permute.xlu0 %259
  %263 = vset.pattern.permute.xlu0 0
  %264 = vperm.xlu0 %263, %v51
  %v265 = vpop.permute.xlu0 %264
  %268 = vset.pattern.permute.xlu0 0
  %269 = vperm.xlu0 %268, %v52
  %v270 = vpop.permute.xlu0 %269
  %v276 = vunpack.c.l.b16 %v45
  %v277 = vunpack.c.l.b16 %v46
  %v278 = vunpack.c.l.b16 %v47
  %v279 = vunpack.c.l.b16 %v48
  %v280 = vpack.c.b16 %v277, %v276
  %v281 = vpack.c.b16 %v279, %v278
  %vm282 = vcmask 523264
  %v284 = vsel %vm282, %v280, 0
  %v287 = vsel %vm282, %v281, 0
  %289 = vmatpush.bf16.msra.mxu0 0
  %290 = vmatpush.bf16.msra.mxu0 0
  %291 = vmatpush.bf16.msra.mxu0 0
  %292 = vmatpush.bf16.msra.mxu0 0
  %293 = vmatpush.bf16.msra.mxu0 %v251
  %294 = vmatpush.bf16.msra.mxu0 %v250
  %295 = vmatpush.bf16.msra.mxu0 %v249
  %296 = vmatpush.bf16.msra.mxu0 %v248
  %297 = vmatmul.bf16.gmra.mxu0 %v284
  %v298 = vpop.f32.mrf.mxu0
  %v299 = vadd.f32 %v255, %v298
  %v300 = vpop.f32.mrf.mxu0
  %v301 = vadd.f32 %v260, %v300
  %302 = vmatmul.bf16.gmra.mxu0 %v287
  %v303 = vpop.f32.mrf.mxu0
  %v304 = vadd.f32 %v265, %v303
  %v305 = vpop.f32.mrf.mxu0
  %v306 = vadd.f32 %v270, %v305
  %307 = vdwg.mxu0
  %v308 = vmax.f32 %v299, 0.0
  %v309 = vmax.f32 %v301, 0.0
  %v310 = vmax.f32 %v304, 0.0
  %v311 = vmax.f32 %v306, 0.0
  %313 = vset.pattern.permute.xlu0 0
  %314 = vperm.xlu0 %313, %v53
  %v315 = vpop.permute.xlu0 %314
  %318 = vset.pattern.permute.xlu0 0
  %319 = vperm.xlu0 %318, %v54
  %v320 = vpop.permute.xlu0 %319
  %323 = vset.pattern.permute.xlu0 0
  %324 = vperm.xlu0 %323, %v55
  %v325 = vpop.permute.xlu0 %324
  %328 = vset.pattern.permute.xlu0 0
  %329 = vperm.xlu0 %328, %v56
  %v330 = vpop.permute.xlu0 %329
  %v332 = vmul.f32 %v308, %v315
  %v333 = vmul.f32 %v309, %v320
  %v334 = vmul.f32 %v310, %v325
  %v335 = vmul.f32 %v311, %v330
  %v336 = vadd.f32 %v332, %v333
  %v337 = vadd.f32 %v336, %v334
  %v338 = vadd.f32 %v337, %v335
  %v339 = vrot.slane %v338, 4
  %v340 = vadd.f32 %v338, %v339
  %v341 = vrot.slane %v340, 2
  %v342 = vadd.f32 %v340, %v341
  %v343 = vrot.slane %v342, 1
  %v344 = vadd.f32 %v342, %v343
  %346 = vset.pattern.permute.xlu0 0
  %347 = vperm.xlu0 %346, %v57
  %v348 = vpop.permute.xlu0 %347
  %v350 = vperm.slane %v348, 0
  %v351 = vadd.f32 %v344, %v350
  %v352 = vxor.u32 %v351, 2147483648
  %v353 = vmul.f32 %v352, 1.442695
  %v354 = vpow.pop %v353
  %v355 = vadd.f32 %v354, 1.0
  %v356 = vrcp.pop %v355
  %v357 = vmul.f32 %v355, %v356
  %v358 = vsub.f32 1.0, %v357
  %v359 = vmul.f32 %v356, %v358
  %v360 = vadd.f32 %v356, %v359
  %vm361 = vweird.f32 %v355
  %vm362 = vweird.f32 %v356
  %vm363 = vmor %vm361, %vm362
  %v364 = vsel %vm363, %v356, %v360
  %v365 = vand.u32 2147483647, %v355
  %vm366 = vcmp.eq.f32.partialorder %v365, 8.507059e+37
  %v367 = vand.u32 %v355, 2147483648
  %v368 = vor.u32 1.1754944e-38, %v367
  %v369 = vsel %vm366, %v368, %v364
  %v370 = vmul.f32 1.0, %v369
  %371 = vst [vmem:[%s7] sm:$0x1] %v370
  // Predicated region
  $region30: #{dnsnet_forward.1} parent=0 // pred_check
    _
  $region31: #{dnsnet_forward.1} parent=0 // pred_check_branch
    %373 = sbr.rel (0) target = $region33
  $region32: #{dnsnet_forward.1} parent=0 // pred_region
    _
  $region33: #{dnsnet_forward.1} parent=0 // pred_fallthru
    _
  // Predicated region
  $region34: #{dnsnet_forward.1} parent=0 // pred_check
    _
  $region35: #{dnsnet_forward.1} parent=0 // pred_check_branch
    %375 = sbr.rel (0) target = $region37
  $region36: #{dnsnet_forward.1} parent=0 // pred_region
    _
  $region37: #{dnsnet_forward.1} parent=0 // pred_fallthru
    _

</llo_original>
